<compile_context>
chip_gen: v7x
topology: tpu7x:2x2x1
jax: 0.10.0
libtpu: 0.0.40
codegen_flags: <defaults>
</compile_context>

<pallas_src>
import jax
import jax.numpy as jnp
from jax.experimental import pallas as pl
from jax.experimental.pallas import tpu as pltpu

_LANE = 128
_SUBLANE = 8


def gcn_fused_kernel(a_ref, x_ref, w1_ref, b1_ref, w2_ref, b2_ref, o_ref):
    """Fused 2-layer GCN on whole (padded) arrays resident in VMEM.

    a_ref : (Np, Np)        normalized adjacency
    x_ref : (Np, Fin_p)     node features
    w1_ref: (Fin_p, H_p)    layer-1 weight      b1_ref: (1, H_p)
    w2_ref: (H_p, Fout_p)   layer-2 weight      b2_ref: (1, Fout_p)
    o_ref : (Np, Fout_p)    output
    """
    a = a_ref[...]
    # ---- layer 1: relu( A @ (X @ W1) + b1 ) ------------------------------
    xw1 = jnp.dot(x_ref[...], w1_ref[...], preferred_element_type=jnp.float32)
    h = jnp.dot(a, xw1, preferred_element_type=jnp.float32) + b1_ref[...]
    h = jnp.maximum(h, 0.0)
    # ---- layer 2: A @ (H @ W2) + b2 --------------------------------------
    hw2 = jnp.dot(h, w2_ref[...], preferred_element_type=jnp.float32)
    out = jnp.dot(a, hw2, preferred_element_type=jnp.float32) + b2_ref[...]
    o_ref[...] = out.astype(o_ref.dtype)


def _round_up(v, m):
    return ((v + m - 1) // m) * m


def _pad2d(x, rows, cols):
    r, c = x.shape
    return jnp.pad(x, ((0, rows - r), (0, cols - c)))


def gcn_forward(a_norm, features, params):
    """Fused 2-layer GCN forward. Pads to lane-dense shapes, runs one
    single-step Pallas kernel, and slices the padding back off."""
    w1, b1, w2, b2 = params
    n, f_in = features.shape
    h_feats = w1.shape[1]
    f_out = w2.shape[1]

    n_p = _round_up(n, _SUBLANE)
    f_in_p = _round_up(f_in, _LANE)
    h_p = _round_up(h_feats, _LANE)
    f_out_p = _round_up(f_out, _LANE)

    a_p = _pad2d(a_norm, n_p, n_p)
    x_p = _pad2d(features, n_p, f_in_p)
    w1_p = _pad2d(w1, f_in_p, h_p)
    b1_p = _pad2d(b1, 1, h_p)
    w2_p = _pad2d(w2, h_p, f_out_p)
    b2_p = _pad2d(b2, 1, f_out_p)

    itemsize = jnp.dtype(features.dtype).itemsize
    flops = 2 * (
        n_p * f_in_p * h_p        # X @ W1
        + n_p * n_p * h_p         # A @ XW1
        + n_p * h_p * f_out_p     # H @ W2
        + n_p * n_p * f_out_p     # A @ HW2
    )
    bytes_accessed = itemsize * (
        a_p.size + x_p.size + w1_p.size + b1_p.size + w2_p.size + b2_p.size
        + n_p * f_out_p
    )

    vmem_spec = lambda: pl.BlockSpec(memory_space=pltpu.MemorySpace.VMEM)

    out_p = pl.pallas_call(
        gcn_fused_kernel,
        out_shape=jax.ShapeDtypeStruct((n_p, f_out_p), features.dtype),
        in_specs=[vmem_spec() for _ in range(6)],
        out_specs=vmem_spec(),
        cost_estimate=pl.CostEstimate(
            flops=flops, transcendentals=0, bytes_accessed=bytes_accessed
        ),
    )(a_p, x_p, w1_p, b1_p, w2_p, b2_p)

    return out_p[:n, :f_out]


def make_normalized_adjacency(adj):
    """Symmetric GCN normalization D^{-1/2} A D^{-1/2}, degrees clamped to 1
    (matches allow_zero_in_degree=True: isolated nodes produce 0)."""
    deg = jnp.maximum(adj.sum(axis=1), 1.0)
    d_inv_sqrt = 1.0 / jnp.sqrt(deg)
    return adj * d_inv_sqrt[:, None] * d_inv_sqrt[None, :]


def init_params(key, in_feats, h_feats, out_feats):
    k1, k2 = jax.random.split(key)
    # Glorot-uniform style init (DGL GraphConv default), zero bias.
    lim1 = (6.0 / (in_feats + h_feats)) ** 0.5
    lim2 = (6.0 / (h_feats + out_feats)) ** 0.5
    w1 = jax.random.uniform(k1, (in_feats, h_feats), jnp.float32, -lim1, lim1)
    b1 = jnp.zeros((1, h_feats), jnp.float32)
    w2 = jax.random.uniform(k2, (h_feats, out_feats), jnp.float32, -lim2, lim2)
    b2 = jnp.zeros((1, out_feats), jnp.float32)
    return w1, b1, w2, b2


if __name__ == "__main__":
    key = jax.random.PRNGKey(0)
    k_adj, k_feat, k_par = jax.random.split(key, 3)

    N = 64          # number of graph nodes
    in_feats = 16
    h_feats = 32
    out_feats = 8

    # Synthetic undirected graph: symmetric 0/1 adjacency, no self-loops.
    a_rand = jax.random.uniform(k_adj, (N, N))
    adj = (a_rand < 0.15).astype(jnp.float32)
    adj = jnp.maximum(adj, adj.T)
    adj = adj * (1.0 - jnp.eye(N, dtype=jnp.float32))
    a_norm = make_normalized_adjacency(adj)

    features = jax.random.normal(k_feat, (N, in_feats), jnp.float32)
    params = init_params(k_par, in_feats, h_feats, out_feats)

    out = gcn_forward(a_norm, features, params)
    out = jax.block_until_ready(out)

    # Pure-JAX reference check.
    w1, b1, w2, b2 = params
    ref = a_norm @ (features @ w1) + b1
    ref = jnp.maximum(ref, 0.0)
    ref = a_norm @ (ref @ w2) + b2
    assert out.shape == (N, out_feats)
    assert jnp.allclose(out, ref, atol=1e-4, rtol=1e-4)

    print("KERNEL_OK")
</pallas_src>

<mosaic_0001>
module attributes {stable_mosaic.version = 11 : i64} {
  func.func @gcn_fused_kernel(%arg0: memref<64x64xf32, #tpu.memory_space<vmem>>, %arg1: memref<64x128xf32, #tpu.memory_space<vmem>>, %arg2: memref<128x128xf32, #tpu.memory_space<vmem>>, %arg3: memref<1x128xf32, #tpu.memory_space<vmem>>, %arg4: memref<128x128xf32, #tpu.memory_space<vmem>>, %arg5: memref<1x128xf32, #tpu.memory_space<vmem>>, %arg6: memref<64x128xf32, #tpu.memory_space<vmem>>) attributes {dimension_semantics = [], scalar_prefetch = 0 : i64, scratch_operands = 0 : i64, tpu.core_type = #tpu.core_type<tc>} {
    %c0 = arith.constant 0 : index
    %c0_0 = arith.constant 0 : index
    %0 = vector.load %arg0[%c0, %c0_0] : memref<64x64xf32, #tpu.memory_space<vmem>>, vector<64x64xf32>
    %c0_1 = arith.constant 0 : index
    %c0_2 = arith.constant 0 : index
    %1 = vector.load %arg1[%c0_1, %c0_2] : memref<64x128xf32, #tpu.memory_space<vmem>>, vector<64x128xf32>
    %c0_3 = arith.constant 0 : index
    %c0_4 = arith.constant 0 : index
    %2 = vector.load %arg2[%c0_3, %c0_4] : memref<128x128xf32, #tpu.memory_space<vmem>>, vector<128x128xf32>
    %cst = arith.constant dense<0.000000e+00> : vector<64x128xf32>
    %3 = tpu.matmul %1, %2, %cst {dimension_numbers = #tpu.dot_dimension_numbers<[1], [0], [0], [1], [0, 0, 1, 1], [], []>} : vector<64x128xf32>, vector<128x128xf32>, vector<64x128xf32> -> vector<64x128xf32>
    %cst_5 = arith.constant dense<0.000000e+00> : vector<64x128xf32>
    %4 = tpu.matmul %0, %3, %cst_5 {dimension_numbers = #tpu.dot_dimension_numbers<[1], [0], [0], [1], [0, 0, 1, 1], [], []>} : vector<64x64xf32>, vector<64x128xf32>, vector<64x128xf32> -> vector<64x128xf32>
    %c0_6 = arith.constant 0 : index
    %c0_7 = arith.constant 0 : index
    %5 = vector.load %arg3[%c0_6, %c0_7] : memref<1x128xf32, #tpu.memory_space<vmem>>, vector<1x128xf32>
    %6 = vector.broadcast %5 : vector<1x128xf32> to vector<64x128xf32>
    %7 = arith.addf %4, %6 : vector<64x128xf32>
    %cst_8 = arith.constant 0.000000e+00 : f32
    %8 = vector.broadcast %cst_8 : f32 to vector<64x128xf32>
    %9 = arith.maximumf %7, %8 : vector<64x128xf32>
    %c0_9 = arith.constant 0 : index
    %c0_10 = arith.constant 0 : index
    %10 = vector.load %arg4[%c0_9, %c0_10] : memref<128x128xf32, #tpu.memory_space<vmem>>, vector<128x128xf32>
    %cst_11 = arith.constant dense<0.000000e+00> : vector<64x128xf32>
    %11 = tpu.matmul %9, %10, %cst_11 {dimension_numbers = #tpu.dot_dimension_numbers<[1], [0], [0], [1], [0, 0, 1, 1], [], []>} : vector<64x128xf32>, vector<128x128xf32>, vector<64x128xf32> -> vector<64x128xf32>
    %cst_12 = arith.constant dense<0.000000e+00> : vector<64x128xf32>
    %12 = tpu.matmul %0, %11, %cst_12 {dimension_numbers = #tpu.dot_dimension_numbers<[1], [0], [0], [1], [0, 0, 1, 1], [], []>} : vector<64x64xf32>, vector<64x128xf32>, vector<64x128xf32> -> vector<64x128xf32>
    %c0_13 = arith.constant 0 : index
    %c0_14 = arith.constant 0 : index
    %13 = vector.load %arg5[%c0_13, %c0_14] : memref<1x128xf32, #tpu.memory_space<vmem>>, vector<1x128xf32>
    %14 = vector.broadcast %13 : vector<1x128xf32> to vector<64x128xf32>
    %15 = arith.addf %12, %14 : vector<64x128xf32>
    %c0_15 = arith.constant 0 : index
    %c0_16 = arith.constant 0 : index
    %16 = vector.load %arg6[%c0_15, %c0_16] : memref<64x128xf32, #tpu.memory_space<vmem>>, vector<64x128xf32>
    tpu.vector_store %arg6[%c0_15, %c0_16], %15 {strides = array<i32>} : memref<64x128xf32, #tpu.memory_space<vmem>>, vector<64x128xf32>,
    return
  }
}

</mosaic_0001>

<llo_original>
// kernel: tpu_custom_call.1
$region0: #{tpu_custom_call.1}
  #allocation0 [shape = 'u32[]', space=smem, size = 0x4, offset = 0x4, fixed_abs, tag = 'smem constant byte address 0x4 - core index']
  #allocation1 [shape = 'u32[144,128]{1,0:T(1,128)}', space=vmem, size = 0x12000, scoped, tag = 'internal scratch']
  %s0 = inlined_call_operand.hbm [shape: f32[64,64], index: 0, kind: input, shape index: {}]
  %s1 = inlined_call_operand.hbm [shape: f32[64,128], index: 1, kind: input, shape index: {}]
  %s2 = inlined_call_operand.hbm [shape: f32[128,128], index: 2, kind: input, shape index: {}]
  %s3 = inlined_call_operand.vmem [shape: f32[1,128], index: 3, kind: input, shape index: {}]
  %s4 = inlined_call_operand.hbm [shape: f32[128,128], index: 4, kind: input, shape index: {}]
  %s5 = inlined_call_operand.vmem [shape: f32[1,128], index: 5, kind: input, shape index: {}]
  %s6 = inlined_call_operand.hbm [shape: f32[64,128], index: 6, kind: output, shape index: {}]
  %s7 = sld [smem:[#allocation0]]
  $region50: #{tpu_custom_call.1} parent=0
    _
  %s9 = ssub.s32 1, %s7
  %s10 = scalar_select 0, %s9, %s7
  $region1: #{tpu_custom_call.1} parent=0
    #allocation2 [shape = 'u8[32768]{0}', space=vmem, size = 0x8000, scoped, tag = 'input window, operand 0, single buffered']
    #allocation3 [shape = 's32[1]{0}', space=sflag, size = 0x4, scoped, tag = 'scoped memory for tpu_custom_call.1']
    #allocation4 [shape = 's32[1]{0}', space=sflag, size = 0x4, scoped, tag = 'scoped memory for tpu_custom_call.1']
    #allocation5 [shape = 'u8[32768]{0}', space=vmem, size = 0x8000, scoped, tag = 'input window, operand 1, single buffered']
    #allocation6 [shape = 's32[1]{0}', space=sflag, size = 0x4, scoped, tag = 'scoped memory for tpu_custom_call.1']
    #allocation7 [shape = 'u8[65536]{0}', space=vmem, size = 0x10000, scoped, tag = 'input window, operand 2, single buffered']
    #allocation8 [shape = 'u8[65536]{0}', space=vmem, size = 0x10000, scoped, tag = 'input window, operand 4, single buffered']
    #allocation9 [shape = 's32[1]{0}', space=sflag, size = 0x4, scoped, tag = 'scoped memory for tpu_custom_call.1']
    #allocation10 [shape = 'u8[32768]{0}', space=vmem, size = 0x8000, scoped, tag = 'output window, operand 0, single buffered']
    %11 = vsyncpa [#allocation3], 0
    %12 = vsyncpa [#allocation6], 0
    %13 = vsyncpa [#allocation9], 0
    %14 = vsyncpa [#allocation4], 0
    // Predicated region
    $region2: #{tpu_custom_call.1} parent=1 // pred_check
      _
    $region3: #{tpu_custom_call.1} parent=1 // pred_check_branch
      %16 = sbr.rel (0) target = $region5
    $region4: #{tpu_custom_call.1} parent=1 // pred_region
      %s18 = ssub.s32 1024, 1024
      %19 = vsyncadd [#allocation3], %s18
      %s20 = sshll.u32 [#allocation2], 4
      %s21 = int_to_ptr.vmem [resolvable:$true] %s20
      %26 = dma.hbm_to_vmem [thread:$0]  %s0, 1024, %s21, [#allocation3], 128, 128, 8
    $region5: #{tpu_custom_call.1} parent=1 // pred_fallthru
      _
    // Predicated region
    $region6: #{tpu_custom_call.1} parent=1 // pred_check
      _
    $region7: #{tpu_custom_call.1} parent=1 // pred_check_branch
      %28 = sbr.rel (0) target = $region9
    $region8: #{tpu_custom_call.1} parent=1 // pred_region
      %s30 = ssub.s32 1024, 1024
      %31 = vsyncadd [#allocation6], %s30
      %s32 = sshll.u32 [#allocation5], 4
      %s33 = int_to_ptr.vmem [resolvable:$true] %s32
      %38 = dma.hbm_to_vmem [thread:$0]  %s1, 1024, %s33, [#allocation6], 128, 128, 8
    $region9: #{tpu_custom_call.1} parent=1 // pred_fallthru
      _
    // Predicated region
    $region10: #{tpu_custom_call.1} parent=1 // pred_check
      _
    $region11: #{tpu_custom_call.1} parent=1 // pred_check_branch
      %40 = sbr.rel (0) target = $region13
    $region12: #{tpu_custom_call.1} parent=1 // pred_region
      %s42 = ssub.s32 2048, 2048
      %43 = vsyncadd [#allocation6], %s42
      %s44 = sshll.u32 [#allocation7], 4
      %s45 = int_to_ptr.vmem [resolvable:$true] %s44
      %50 = dma.hbm_to_vmem [thread:$0]  %s2, 2048, %s45, [#allocation6], 128, 128, 8
    $region13: #{tpu_custom_call.1} parent=1 // pred_fallthru
      _
    // Predicated region
    $region14: #{tpu_custom_call.1} parent=1 // pred_check
      _
    $region15: #{tpu_custom_call.1} parent=1 // pred_check_branch
      %52 = sbr.rel (0) target = $region17
    $region16: #{tpu_custom_call.1} parent=1 // pred_region
      _
    $region17: #{tpu_custom_call.1} parent=1 // pred_fallthru
      _
    // Predicated region
    $region18: #{tpu_custom_call.1} parent=1 // pred_check
      _
    $region19: #{tpu_custom_call.1} parent=1 // pred_check_branch
      %54 = sbr.rel (0) target = $region21
    $region20: #{tpu_custom_call.1} parent=1 // pred_region
      %s56 = ssub.s32 2048, 2048
      %57 = vsyncadd [#allocation9], %s56
      %s58 = sshll.u32 [#allocation8], 4
      %s59 = int_to_ptr.vmem [resolvable:$true] %s58
      %64 = dma.hbm_to_vmem [thread:$0]  %s4, 2048, %s59, [#allocation9], 128, 128, 8
    $region21: #{tpu_custom_call.1} parent=1 // pred_fallthru
      _
    // Predicated region
    $region22: #{tpu_custom_call.1} parent=1 // pred_check
      _
    $region23: #{tpu_custom_call.1} parent=1 // pred_check_branch
      %66 = sbr.rel (0) target = $region25
    $region24: #{tpu_custom_call.1} parent=1 // pred_region
      _
    $region25: #{tpu_custom_call.1} parent=1 // pred_fallthru
      _
    // Predicated region
    $region26: #{tpu_custom_call.1} parent=1 // pred_check
      _
    $region27: #{tpu_custom_call.1} parent=1 // pred_check_branch
      %68 = sbr.rel (0) target = $region29
    $region28: #{tpu_custom_call.1} parent=1 // pred_region
      %69 = dma.done [#allocation3], 1024
    $region29: #{tpu_custom_call.1} parent=1 // pred_fallthru
      _
    // Predicated region
    $region30: #{tpu_custom_call.1} parent=1 // pred_check
      _
    $region31: #{tpu_custom_call.1} parent=1 // pred_check_branch
      %71 = sbr.rel (0) target = $region33
    $region32: #{tpu_custom_call.1} parent=1 // pred_region
      %72 = dma.done [#allocation6], 1024
    $region33: #{tpu_custom_call.1} parent=1 // pred_fallthru
      _
    // Predicated region
    $region34: #{tpu_custom_call.1} parent=1 // pred_check
      _
    $region35: #{tpu_custom_call.1} parent=1 // pred_check_branch
      %74 = sbr.rel (0) target = $region37
    $region36: #{tpu_custom_call.1} parent=1 // pred_region
      %75 = dma.done [#allocation6], 2048
    $region37: #{tpu_custom_call.1} parent=1 // pred_fallthru
      _
    // Predicated region
    $region38: #{tpu_custom_call.1} parent=1 // pred_check
      _
    $region39: #{tpu_custom_call.1} parent=1 // pred_check_branch
      %77 = sbr.rel (0) target = $region41
    $region40: #{tpu_custom_call.1} parent=1 // pred_region
      %78 = dma.done [#allocation9], 2048
    $region41: #{tpu_custom_call.1} parent=1 // pred_fallthru
      _
    %v79 = vld [vmem:[#allocation2] sm:$0xff]
    %v80 = vld [vmem:[#allocation2 + $0x8] sm:$0xff]
    %v81 = vld [vmem:[#allocation2 + $0x10] sm:$0xff]
    %v82 = vld [vmem:[#allocation2 + $0x18] sm:$0xff]
    %v83 = vld [vmem:[#allocation2 + $0x20] sm:$0xff]
    %v84 = vld [vmem:[#allocation2 + $0x28] sm:$0xff]
    %v85 = vld [vmem:[#allocation2 + $0x30] sm:$0xff]
    %v86 = vld [vmem:[#allocation2 + $0x38] sm:$0xff]
    %v87 = vld [vmem:[#allocation5] sm:$0xff]
    %v88 = vld [vmem:[#allocation5 + $0x8] sm:$0xff]
    %v89 = vld [vmem:[#allocation5 + $0x10] sm:$0xff]
    %v90 = vld [vmem:[#allocation5 + $0x18] sm:$0xff]
    %v91 = vld [vmem:[#allocation5 + $0x20] sm:$0xff]
    %v92 = vld [vmem:[#allocation5 + $0x28] sm:$0xff]
    %v93 = vld [vmem:[#allocation5 + $0x30] sm:$0xff]
    %v94 = vld [vmem:[#allocation5 + $0x38] sm:$0xff]
    %v95 = vld [vmem:[#allocation7] sm:$0xff]
    %v96 = vld [vmem:[#allocation7 + $0x8] sm:$0xff]
    %v97 = vld [vmem:[#allocation7 + $0x10] sm:$0xff]
    %v98 = vld [vmem:[#allocation7 + $0x18] sm:$0xff]
    %v99 = vld [vmem:[#allocation7 + $0x20] sm:$0xff]
    %v100 = vld [vmem:[#allocation7 + $0x28] sm:$0xff]
    %v101 = vld [vmem:[#allocation7 + $0x30] sm:$0xff]
    %v102 = vld [vmem:[#allocation7 + $0x38] sm:$0xff]
    %v103 = vld [vmem:[#allocation7 + $0x40] sm:$0xff]
    %v104 = vld [vmem:[#allocation7 + $0x48] sm:$0xff]
    %v105 = vld [vmem:[#allocation7 + $0x50] sm:$0xff]
    %v106 = vld [vmem:[#allocation7 + $0x58] sm:$0xff]
    %v107 = vld [vmem:[#allocation7 + $0x60] sm:$0xff]
    %v108 = vld [vmem:[#allocation7 + $0x68] sm:$0xff]
    %v109 = vld [vmem:[#allocation7 + $0x70] sm:$0xff]
    %v110 = vld [vmem:[#allocation7 + $0x78] sm:$0xff]
    %111 = vmatprep.subr.mxu0 0.0
    %112 = vmatpush1.msra.mxu0 %v95
    %113 = vmatprep.subr.mxu0 0.0
    %114 = vmatpush1.msra.mxu0 %v96
    %115 = vmatprep.subr.mxu0 0.0
    %116 = vmatpush1.msra.mxu0 %v97
    %117 = vmatprep.subr.mxu0 0.0
    %118 = vmatpush1.msra.mxu0 %v98
    %119 = vmatprep.subr.mxu0 0.0
    %120 = vmatpush1.msra.mxu0 %v99
    %121 = vmatprep.subr.mxu0 0.0
    %122 = vmatpush1.msra.mxu0 %v100
    %123 = vmatprep.subr.mxu0 0.0
    %124 = vmatpush1.msra.mxu0 %v101
    %125 = vmatprep.subr.mxu0 0.0
    %126 = vmatpush1.msra.mxu0 %v102
    %127 = vmatprep.subr.mxu0 0.0
    %128 = vmatpush1.msra.mxu0 %v103
    %129 = vmatprep.subr.mxu0 0.0
    %130 = vmatpush1.msra.mxu0 %v104
    %131 = vmatprep.subr.mxu0 0.0
    %132 = vmatpush1.msra.mxu0 %v105
    %133 = vmatprep.subr.mxu0 0.0
    %134 = vmatpush1.msra.mxu0 %v106
    %135 = vmatprep.subr.mxu0 0.0
    %136 = vmatpush1.msra.mxu0 %v107
    %137 = vmatprep.subr.mxu0 0.0
    %138 = vmatpush1.msra.mxu0 %v108
    %139 = vmatprep.subr.mxu0 0.0
    %140 = vmatpush1.msra.mxu0 %v109
    %141 = vmatprep.subr.mxu0 0.0
    %142 = vmatpush1.msra.mxu0 %v110
    %143 = vmatprep.subr.mxu0 0.0
    %144 = vmatpush1.msra.mxu0 0.0
    %145 = vmatprep.subr.mxu0 0.0
    %146 = vmatpush1.msra.mxu0 0.0
    %147 = vmatprep.subr.mxu0 0.0
    %148 = vmatpush1.msra.mxu0 0.0
    %149 = vmatprep.subr.mxu0 0.0
    %150 = vmatpush1.msra.mxu0 0.0
    %151 = vmatprep.subr.mxu0 0.0
    %152 = vmatpush1.msra.mxu0 0.0
    %153 = vmatprep.subr.mxu0 0.0
    %154 = vmatpush1.msra.mxu0 0.0
    %155 = vmatprep.subr.mxu0 0.0
    %156 = vmatpush1.msra.mxu0 0.0
    %157 = vmatprep.subr.mxu0 0.0
    %158 = vmatpush1.msra.mxu0 0.0
    %159 = vmatprep.subr.mxu0 0.0
    %160 = vmatpush1.msra.mxu0 0.0
    %161 = vmatprep.subr.mxu0 0.0
    %162 = vmatpush1.msra.mxu0 0.0
    %163 = vmatprep.subr.mxu0 0.0
    %164 = vmatpush1.msra.mxu0 0.0
    %165 = vmatprep.subr.mxu0 0.0
    %166 = vmatpush1.msra.mxu0 0.0
    %167 = vmatprep.subr.mxu0 0.0
    %168 = vmatpush1.msra.mxu0 0.0
    %169 = vmatprep.subr.mxu0 0.0
    %170 = vmatpush1.msra.mxu0 0.0
    %171 = vmatprep.subr.mxu0 0.0
    %172 = vmatpush1.msra.mxu0 0.0
    %173 = vmatprep.subr.mxu0 0.0
    %174 = vmatpush1.msra.mxu0 0.0
    %175 = vmatprep.mubr.f32.mxu0 0.0
    %176 = vmatmul.mubr.f32.gmra.mrb[0].mxu0 %v87
    %v177 = vpop.f32.mrb[0].mxu0
    %v178 = vadd.f32 0.0, %v177
    %v179 = vpop.f32.mrb[0].mxu0
    %180 = vmatprep.mubr.f32.mxu0 0.0
    %181 = vmatmul.mubr.f32.gmra.mrb[0].mxu0 %v88
    %v182 = vpop.f32.mrb[0].mxu0
    %v183 = vadd.f32 0.0, %v182
    %v184 = vpop.f32.mrb[0].mxu0
    %185 = vmatprep.mubr.f32.mxu0 0.0
    %186 = vmatmul.mubr.f32.gmra.mrb[0].mxu0 %v89
    %v187 = vpop.f32.mrb[0].mxu0
    %v188 = vadd.f32 0.0, %v187
    %v189 = vpop.f32.mrb[0].mxu0
    %190 = vmatprep.mubr.f32.mxu0 0.0
    %191 = vmatmul.mubr.f32.gmra.mrb[0].mxu0 %v90
    %v192 = vpop.f32.mrb[0].mxu0
    %v193 = vadd.f32 0.0, %v192
    %v194 = vpop.f32.mrb[0].mxu0
    %195 = vmatprep.mubr.f32.mxu0 0.0
    %196 = vmatmul.mubr.f32.gmra.mrb[0].mxu0 %v91
    %v197 = vpop.f32.mrb[0].mxu0
    %v198 = vadd.f32 0.0, %v197
    %v199 = vpop.f32.mrb[0].mxu0
    %200 = vmatprep.mubr.f32.mxu0 0.0
    %201 = vmatmul.mubr.f32.gmra.mrb[0].mxu0 %v92
    %v202 = vpop.f32.mrb[0].mxu0
    %v203 = vadd.f32 0.0, %v202
    %v204 = vpop.f32.mrb[0].mxu0
    %205 = vmatprep.mubr.f32.mxu0 0.0
    %206 = vmatmul.mubr.f32.gmra.mrb[0].mxu0 %v93
    %v207 = vpop.f32.mrb[0].mxu0
    %v208 = vadd.f32 0.0, %v207
    %v209 = vpop.f32.mrb[0].mxu0
    %210 = vmatprep.mubr.f32.mxu0 0.0
    %211 = vmatmul.mubr.f32.gmra.mrb[0].mxu0 %v94
    %v212 = vpop.f32.mrb[0].mxu0
    %v213 = vadd.f32 0.0, %v212
    %v214 = vpop.f32.mrb[0].mxu0
    %215 = vdwg.mxu0
    %v216 = vld [vmem:[%s3] sm:$0x1]
    %v218 = vlaneseq
    %v219 = vshrl.u32 %v218, 7
    %v220 = vsub.s32 0, %v219
    %v221 = vrot.slane %v216, %v220
    %vm223 = vcmask 523264
    %v225 = vsel %vm223, %v79, 0
    %v228 = vsel %vm223, %v80, 0
    %v231 = vsel %vm223, %v81, 0
    %v234 = vsel %vm223, %v82, 0
    %v237 = vsel %vm223, %v83, 0
    %v240 = vsel %vm223, %v84, 0
    %v243 = vsel %vm223, %v85, 0
    %v246 = vsel %vm223, %v86, 0
    %248 = vmatprep.subr.mxu0 0.0
    %249 = vmatpush1.msra.mxu0 %v178
    %250 = vmatprep.subr.mxu0 0.0
    %251 = vmatpush1.msra.mxu0 %v183
    %252 = vmatprep.subr.mxu0 0.0
    %253 = vmatpush1.msra.mxu0 %v188
    %254 = vmatprep.subr.mxu0 0.0
    %255 = vmatpush1.msra.mxu0 %v193
    %256 = vmatprep.subr.mxu0 0.0
    %257 = vmatpush1.msra.mxu0 %v198
    %258 = vmatprep.subr.mxu0 0.0
    %259 = vmatpush1.msra.mxu0 %v203
    %260 = vmatprep.subr.mxu0 0.0
    %261 = vmatpush1.msra.mxu0 %v208
    %262 = vmatprep.subr.mxu0 0.0
    %263 = vmatpush1.msra.mxu0 %v213
    %264 = vmatprep.subr.mxu0 0.0
    %265 = vmatpush1.msra.mxu0 0.0
    %266 = vmatprep.subr.mxu0 0.0
    %267 = vmatpush1.msra.mxu0 0.0
    %268 = vmatprep.subr.mxu0 0.0
    %269 = vmatpush1.msra.mxu0 0.0
    %270 = vmatprep.subr.mxu0 0.0
    %271 = vmatpush1.msra.mxu0 0.0
    %272 = vmatprep.subr.mxu0 0.0
    %273 = vmatpush1.msra.mxu0 0.0
    %274 = vmatprep.subr.mxu0 0.0
    %275 = vmatpush1.msra.mxu0 0.0
    %276 = vmatprep.subr.mxu0 0.0
    %277 = vmatpush1.msra.mxu0 0.0
    %278 = vmatprep.subr.mxu0 0.0
    %279 = vmatpush1.msra.mxu0 0.0
    %280 = vmatprep.subr.mxu0 0.0
    %281 = vmatpush1.msra.mxu0 0.0
    %282 = vmatprep.subr.mxu0 0.0
    %283 = vmatpush1.msra.mxu0 0.0
    %284 = vmatprep.subr.mxu0 0.0
    %285 = vmatpush1.msra.mxu0 0.0
    %286 = vmatprep.subr.mxu0 0.0
    %287 = vmatpush1.msra.mxu0 0.0
    %288 = vmatprep.subr.mxu0 0.0
    %289 = vmatpush1.msra.mxu0 0.0
    %290 = vmatprep.subr.mxu0 0.0
    %291 = vmatpush1.msra.mxu0 0.0
    %292 = vmatprep.subr.mxu0 0.0
    %293 = vmatpush1.msra.mxu0 0.0
    %294 = vmatprep.subr.mxu0 0.0
    %295 = vmatpush1.msra.mxu0 0.0
    %296 = vmatprep.subr.mxu0 0.0
    %297 = vmatpush1.msra.mxu0 0.0
    %298 = vmatprep.subr.mxu0 0.0
    %299 = vmatpush1.msra.mxu0 0.0
    %300 = vmatprep.subr.mxu0 0.0
    %301 = vmatpush1.msra.mxu0 0.0
    %302 = vmatprep.subr.mxu0 0.0
    %303 = vmatpush1.msra.mxu0 0.0
    %304 = vmatprep.subr.mxu0 0.0
    %305 = vmatpush1.msra.mxu0 0.0
    %306 = vmatprep.subr.mxu0 0.0
    %307 = vmatpush1.msra.mxu0 0.0
    %308 = vmatprep.subr.mxu0 0.0
    %309 = vmatpush1.msra.mxu0 0.0
    %310 = vmatprep.subr.mxu0 0.0
    %311 = vmatpush1.msra.mxu0 0.0
    %312 = vmatprep.mubr.f32.mxu0 0.0
    %313 = vmatmul.mubr.f32.gmra.mrb[0].mxu0 %v225
    %v314 = vpop.f32.mrb[0].mxu0
    %v315 = vadd.f32 %v221, %v314
    %v316 = vpop.f32.mrb[0].mxu0
    %317 = vmatprep.mubr.f32.mxu0 0.0
    %318 = vmatmul.mubr.f32.gmra.mrb[0].mxu0 %v228
    %v319 = vpop.f32.mrb[0].mxu0
    %v320 = vadd.f32 %v221, %v319
    %v321 = vpop.f32.mrb[0].mxu0
    %322 = vmatprep.mubr.f32.mxu0 0.0
    %323 = vmatmul.mubr.f32.gmra.mrb[0].mxu0 %v231
    %v324 = vpop.f32.mrb[0].mxu0
    %v325 = vadd.f32 %v221, %v324
    %v326 = vpop.f32.mrb[0].mxu0
    %327 = vmatprep.mubr.f32.mxu0 0.0
    %328 = vmatmul.mubr.f32.gmra.mrb[0].mxu0 %v234
    %v329 = vpop.f32.mrb[0].mxu0
    %v330 = vadd.f32 %v221, %v329
    %v331 = vpop.f32.mrb[0].mxu0
    %332 = vmatprep.mubr.f32.mxu0 0.0
    %333 = vmatmul.mubr.f32.gmra.mrb[0].mxu0 %v237
    %v334 = vpop.f32.mrb[0].mxu0
    %v335 = vadd.f32 %v221, %v334
    %v336 = vpop.f32.mrb[0].mxu0
    %337 = vmatprep.mubr.f32.mxu0 0.0
    %338 = vmatmul.mubr.f32.gmra.mrb[0].mxu0 %v240
    %v339 = vpop.f32.mrb[0].mxu0
    %v340 = vadd.f32 %v221, %v339
    %v341 = vpop.f32.mrb[0].mxu0
    %342 = vmatprep.mubr.f32.mxu0 0.0
    %343 = vmatmul.mubr.f32.gmra.mrb[0].mxu0 %v243
    %v344 = vpop.f32.mrb[0].mxu0
    %v345 = vadd.f32 %v221, %v344
    %v346 = vpop.f32.mrb[0].mxu0
    %347 = vmatprep.mubr.f32.mxu0 0.0
    %348 = vmatmul.mubr.f32.gmra.mrb[0].mxu0 %v246
    %v349 = vpop.f32.mrb[0].mxu0
    %v350 = vadd.f32 %v221, %v349
    %v351 = vpop.f32.mrb[0].mxu0
    %352 = vdwg.mxu0
    %v353 = vmax.f32 %v315, 0.0
    %v354 = vmax.f32 %v320, 0.0
    %v355 = vmax.f32 %v325, 0.0
    %v356 = vmax.f32 %v330, 0.0
    %v357 = vmax.f32 %v335, 0.0
    %v358 = vmax.f32 %v340, 0.0
    %v359 = vmax.f32 %v345, 0.0
    %v360 = vmax.f32 %v350, 0.0
    %v361 = vld [vmem:[#allocation8] sm:$0xff]
    %v362 = vld [vmem:[#allocation8 + $0x8] sm:$0xff]
    %v363 = vld [vmem:[#allocation8 + $0x10] sm:$0xff]
    %v364 = vld [vmem:[#allocation8 + $0x18] sm:$0xff]
    %v365 = vld [vmem:[#allocation8 + $0x20] sm:$0xff]
    %v366 = vld [vmem:[#allocation8 + $0x28] sm:$0xff]
    %v367 = vld [vmem:[#allocation8 + $0x30] sm:$0xff]
    %v368 = vld [vmem:[#allocation8 + $0x38] sm:$0xff]
    %v369 = vld [vmem:[#allocation8 + $0x40] sm:$0xff]
    %v370 = vld [vmem:[#allocation8 + $0x48] sm:$0xff]
    %v371 = vld [vmem:[#allocation8 + $0x50] sm:$0xff]
    %v372 = vld [vmem:[#allocation8 + $0x58] sm:$0xff]
    %v373 = vld [vmem:[#allocation8 + $0x60] sm:$0xff]
    %v374 = vld [vmem:[#allocation8 + $0x68] sm:$0xff]
    %v375 = vld [vmem:[#allocation8 + $0x70] sm:$0xff]
    %v376 = vld [vmem:[#allocation8 + $0x78] sm:$0xff]
    %377 = vmatprep.subr.mxu0 0.0
    %378 = vmatpush1.msra.mxu0 %v361
    %379 = vmatprep.subr.mxu0 0.0
    %380 = vmatpush1.msra.mxu0 %v362
    %381 = vmatprep.subr.mxu0 0.0
    %382 = vmatpush1.msra.mxu0 %v363
    %383 = vmatprep.subr.mxu0 0.0
    %384 = vmatpush1.msra.mxu0 %v364
    %385 = vmatprep.subr.mxu0 0.0
    %386 = vmatpush1.msra.mxu0 %v365
    %387 = vmatprep.subr.mxu0 0.0
    %388 = vmatpush1.msra.mxu0 %v366
    %389 = vmatprep.subr.mxu0 0.0
    %390 = vmatpush1.msra.mxu0 %v367
    %391 = vmatprep.subr.mxu0 0.0
    %392 = vmatpush1.msra.mxu0 %v368
    %393 = vmatprep.subr.mxu0 0.0
    %394 = vmatpush1.msra.mxu0 %v369
    %395 = vmatprep.subr.mxu0 0.0
    %396 = vmatpush1.msra.mxu0 %v370
    %397 = vmatprep.subr.mxu0 0.0
    %398 = vmatpush1.msra.mxu0 %v371
    %399 = vmatprep.subr.mxu0 0.0
    %400 = vmatpush1.msra.mxu0 %v372
    %401 = vmatprep.subr.mxu0 0.0
    %402 = vmatpush1.msra.mxu0 %v373
    %403 = vmatprep.subr.mxu0 0.0
    %404 = vmatpush1.msra.mxu0 %v374
    %405 = vmatprep.subr.mxu0 0.0
    %406 = vmatpush1.msra.mxu0 %v375
    %407 = vmatprep.subr.mxu0 0.0
    %408 = vmatpush1.msra.mxu0 %v376
    %409 = vmatprep.subr.mxu0 0.0
    %410 = vmatpush1.msra.mxu0 0.0
    %411 = vmatprep.subr.mxu0 0.0
    %412 = vmatpush1.msra.mxu0 0.0
    %413 = vmatprep.subr.mxu0 0.0
    %414 = vmatpush1.msra.mxu0 0.0
    %415 = vmatprep.subr.mxu0 0.0
    %416 = vmatpush1.msra.mxu0 0.0
    %417 = vmatprep.subr.mxu0 0.0
    %418 = vmatpush1.msra.mxu0 0.0
    %419 = vmatprep.subr.mxu0 0.0
    %420 = vmatpush1.msra.mxu0 0.0
    %421 = vmatprep.subr.mxu0 0.0
    %422 = vmatpush1.msra.mxu0 0.0
    %423 = vmatprep.subr.mxu0 0.0
    %424 = vmatpush1.msra.mxu0 0.0
    %425 = vmatprep.subr.mxu0 0.0
    %426 = vmatpush1.msra.mxu0 0.0
    %427 = vmatprep.subr.mxu0 0.0
    %428 = vmatpush1.msra.mxu0 0.0
    %429 = vmatprep.subr.mxu0 0.0
    %430 = vmatpush1.msra.mxu0 0.0
    %431 = vmatprep.subr.mxu0 0.0
    %432 = vmatpush1.msra.mxu0 0.0
    %433 = vmatprep.subr.mxu0 0.0
    %434 = vmatpush1.msra.mxu0 0.0
    %435 = vmatprep.subr.mxu0 0.0
    %436 = vmatpush1.msra.mxu0 0.0
    %437 = vmatprep.subr.mxu0 0.0
    %438 = vmatpush1.msra.mxu0 0.0
    %439 = vmatprep.subr.mxu0 0.0
    %440 = vmatpush1.msra.mxu0 0.0
    %441 = vmatprep.mubr.f32.mxu0 0.0
    %442 = vmatmul.mubr.f32.gmra.mrb[0].mxu0 %v353
    %v443 = vpop.f32.mrb[0].mxu0
    %v444 = vadd.f32 0.0, %v443
    %v445 = vpop.f32.mrb[0].mxu0
    %446 = vmatprep.mubr.f32.mxu0 0.0
    %447 = vmatmul.mubr.f32.gmra.mrb[0].mxu0 %v354
    %v448 = vpop.f32.mrb[0].mxu0
    %v449 = vadd.f32 0.0, %v448
    %v450 = vpop.f32.mrb[0].mxu0
    %451 = vmatprep.mubr.f32.mxu0 0.0
    %452 = vmatmul.mubr.f32.gmra.mrb[0].mxu0 %v355
    %v453 = vpop.f32.mrb[0].mxu0
    %v454 = vadd.f32 0.0, %v453
    %v455 = vpop.f32.mrb[0].mxu0
    %456 = vmatprep.mubr.f32.mxu0 0.0
    %457 = vmatmul.mubr.f32.gmra.mrb[0].mxu0 %v356
    %v458 = vpop.f32.mrb[0].mxu0
    %v459 = vadd.f32 0.0, %v458
    %v460 = vpop.f32.mrb[0].mxu0
    %461 = vmatprep.mubr.f32.mxu0 0.0
    %462 = vmatmul.mubr.f32.gmra.mrb[0].mxu0 %v357
    %v463 = vpop.f32.mrb[0].mxu0
    %v464 = vadd.f32 0.0, %v463
    %v465 = vpop.f32.mrb[0].mxu0
    %466 = vmatprep.mubr.f32.mxu0 0.0
    %467 = vmatmul.mubr.f32.gmra.mrb[0].mxu0 %v358
    %v468 = vpop.f32.mrb[0].mxu0
    %v469 = vadd.f32 0.0, %v468
    %v470 = vpop.f32.mrb[0].mxu0
    %471 = vmatprep.mubr.f32.mxu0 0.0
    %472 = vmatmul.mubr.f32.gmra.mrb[0].mxu0 %v359
    %v473 = vpop.f32.mrb[0].mxu0
    %v474 = vadd.f32 0.0, %v473
    %v475 = vpop.f32.mrb[0].mxu0
    %476 = vmatprep.mubr.f32.mxu0 0.0
    %477 = vmatmul.mubr.f32.gmra.mrb[0].mxu0 %v360
    %v478 = vpop.f32.mrb[0].mxu0
    %v479 = vadd.f32 0.0, %v478
    %v480 = vpop.f32.mrb[0].mxu0
    %481 = vdwg.mxu0
    %v482 = vld [vmem:[%s5] sm:$0x1]
    %v484 = vlaneseq
    %v485 = vshrl.u32 %v484, 7
    %v486 = vsub.s32 0, %v485
    %v487 = vrot.slane %v482, %v486
    %489 = vmatprep.subr.mxu0 0.0
    %490 = vmatpush1.msra.mxu0 %v444
    %491 = vmatprep.subr.mxu0 0.0
    %492 = vmatpush1.msra.mxu0 %v449
    %493 = vmatprep.subr.mxu0 0.0
    %494 = vmatpush1.msra.mxu0 %v454
    %495 = vmatprep.subr.mxu0 0.0
    %496 = vmatpush1.msra.mxu0 %v459
    %497 = vmatprep.subr.mxu0 0.0
    %498 = vmatpush1.msra.mxu0 %v464
    %499 = vmatprep.subr.mxu0 0.0
    %500 = vmatpush1.msra.mxu0 %v469
    %501 = vmatprep.subr.mxu0 0.0
    %502 = vmatpush1.msra.mxu0 %v474
    %503 = vmatprep.subr.mxu0 0.0
    %504 = vmatpush1.msra.mxu0 %v479
    %505 = vmatprep.subr.mxu0 0.0
    %506 = vmatpush1.msra.mxu0 0.0
    %507 = vmatprep.subr.mxu0 0.0
    %508 = vmatpush1.msra.mxu0 0.0
    %509 = vmatprep.subr.mxu0 0.0
    %510 = vmatpush1.msra.mxu0 0.0
    %511 = vmatprep.subr.mxu0 0.0
    %512 = vmatpush1.msra.mxu0 0.0
    %513 = vmatprep.subr.mxu0 0.0
    %514 = vmatpush1.msra.mxu0 0.0
    %515 = vmatprep.subr.mxu0 0.0
    %516 = vmatpush1.msra.mxu0 0.0
    %517 = vmatprep.subr.mxu0 0.0
    %518 = vmatpush1.msra.mxu0 0.0
    %519 = vmatprep.subr.mxu0 0.0
    %520 = vmatpush1.msra.mxu0 0.0
    %521 = vmatprep.subr.mxu0 0.0
    %522 = vmatpush1.msra.mxu0 0.0
    %523 = vmatprep.subr.mxu0 0.0
    %524 = vmatpush1.msra.mxu0 0.0
    %525 = vmatprep.subr.mxu0 0.0
    %526 = vmatpush1.msra.mxu0 0.0
    %527 = vmatprep.subr.mxu0 0.0
    %528 = vmatpush1.msra.mxu0 0.0
    %529 = vmatprep.subr.mxu0 0.0
    %530 = vmatpush1.msra.mxu0 0.0
    %531 = vmatprep.subr.mxu0 0.0
    %532 = vmatpush1.msra.mxu0 0.0
    %533 = vmatprep.subr.mxu0 0.0
    %534 = vmatpush1.msra.mxu0 0.0
    %535 = vmatprep.subr.mxu0 0.0
    %536 = vmatpush1.msra.mxu0 0.0
    %537 = vmatprep.subr.mxu0 0.0
    %538 = vmatpush1.msra.mxu0 0.0
    %539 = vmatprep.subr.mxu0 0.0
    %540 = vmatpush1.msra.mxu0 0.0
    %541 = vmatprep.subr.mxu0 0.0
    %542 = vmatpush1.msra.mxu0 0.0
    %543 = vmatprep.subr.mxu0 0.0
    %544 = vmatpush1.msra.mxu0 0.0
    %545 = vmatprep.subr.mxu0 0.0
    %546 = vmatpush1.msra.mxu0 0.0
    %547 = vmatprep.subr.mxu0 0.0
    %548 = vmatpush1.msra.mxu0 0.0
    %549 = vmatprep.subr.mxu0 0.0
    %550 = vmatpush1.msra.mxu0 0.0
    %551 = vmatprep.subr.mxu0 0.0
    %552 = vmatpush1.msra.mxu0 0.0
    %553 = vmatprep.mubr.f32.mxu0 0.0
    %554 = vmatmul.mubr.f32.gmra.mrb[0].mxu0 %v225
    %v555 = vpop.f32.mrb[0].mxu0
    %v556 = vadd.f32 %v487, %v555
    %v557 = vpop.f32.mrb[0].mxu0
    %558 = vmatprep.mubr.f32.mxu0 0.0
    %559 = vmatmul.mubr.f32.gmra.mrb[0].mxu0 %v228
    %v560 = vpop.f32.mrb[0].mxu0
    %v561 = vadd.f32 %v487, %v560
    %v562 = vpop.f32.mrb[0].mxu0
    %563 = vmatprep.mubr.f32.mxu0 0.0
    %564 = vmatmul.mubr.f32.gmra.mrb[0].mxu0 %v231
    %v565 = vpop.f32.mrb[0].mxu0
    %v566 = vadd.f32 %v487, %v565
    %v567 = vpop.f32.mrb[0].mxu0
    %568 = vmatprep.mubr.f32.mxu0 0.0
    %569 = vmatmul.mubr.f32.gmra.mrb[0].mxu0 %v234
    %v570 = vpop.f32.mrb[0].mxu0
    %v571 = vadd.f32 %v487, %v570
    %v572 = vpop.f32.mrb[0].mxu0
    %573 = vmatprep.mubr.f32.mxu0 0.0
    %574 = vmatmul.mubr.f32.gmra.mrb[0].mxu0 %v237
    %v575 = vpop.f32.mrb[0].mxu0
    %v576 = vadd.f32 %v487, %v575
    %v577 = vpop.f32.mrb[0].mxu0
    %578 = vmatprep.mubr.f32.mxu0 0.0
    %579 = vmatmul.mubr.f32.gmra.mrb[0].mxu0 %v240
    %v580 = vpop.f32.mrb[0].mxu0
    %v581 = vadd.f32 %v487, %v580
    %v582 = vpop.f32.mrb[0].mxu0
    %583 = vmatprep.mubr.f32.mxu0 0.0
    %584 = vmatmul.mubr.f32.gmra.mrb[0].mxu0 %v243
    %v585 = vpop.f32.mrb[0].mxu0
    %v586 = vadd.f32 %v487, %v585
    %v587 = vpop.f32.mrb[0].mxu0
    %588 = vmatprep.mubr.f32.mxu0 0.0
    %589 = vmatmul.mubr.f32.gmra.mrb[0].mxu0 %v246
    %v590 = vpop.f32.mrb[0].mxu0
    %v591 = vadd.f32 %v487, %v590
    %v592 = vpop.f32.mrb[0].mxu0
    %593 = vdwg.mxu0
    %594 = vst [vmem:[#allocation10] sm:$0xff] %v556
    %595 = vst [vmem:[#allocation10 + $0x8] sm:$0xff] %v561
    %596 = vst [vmem:[#allocation10 + $0x10] sm:$0xff] %v566
    %597 = vst [vmem:[#allocation10 + $0x18] sm:$0xff] %v571
    %598 = vst [vmem:[#allocation10 + $0x20] sm:$0xff] %v576
    %599 = vst [vmem:[#allocation10 + $0x28] sm:$0xff] %v581
    %600 = vst [vmem:[#allocation10 + $0x30] sm:$0xff] %v586
    %601 = vst [vmem:[#allocation10 + $0x38] sm:$0xff] %v591
    // Predicated region
    $region42: #{tpu_custom_call.1} parent=1 // pred_check
      _
    $region43: #{tpu_custom_call.1} parent=1 // pred_check_branch
      %603 = sbr.rel (0) target = $region45
    $region44: #{tpu_custom_call.1} parent=1 // pred_region
      %s605 = ssub.s32 1024, 1024
      %606 = vsyncadd [#allocation4], %s605
      %s607 = sshll.u32 [#allocation10], 4
      %s608 = int_to_ptr.vmem [resolvable:$true] %s607
      %613 = dma.vmem_to_hbm [thread:$0]  %s608, 1024, %s6, [#allocation4], 128, 128, 8
    $region45: #{tpu_custom_call.1} parent=1 // pred_fallthru
      _
    // Predicated region
    $region46: #{tpu_custom_call.1} parent=1 // pred_check
      _
    $region47: #{tpu_custom_call.1} parent=1 // pred_check_branch
      %615 = sbr.rel (0) target = $region49
    $region48: #{tpu_custom_call.1} parent=1 // pred_region
      %616 = dma.done [#allocation4], 1024
    $region49: #{tpu_custom_call.1} parent=1 // pred_fallthru
      _
    %617 = vsyncpa [#allocation3], 1
    %618 = vsyncpa [#allocation6], 1
    %619 = vsyncpa [#allocation9], 1
    %620 = vsyncpa [#allocation4], 1

</llo_original>
